<compile_context>
chip_gen: v7x
topology: tpu7x:2x2x1
jax: 0.10.0
libtpu: 0.0.40
codegen_flags: <defaults>
</compile_context>

<pallas_src>
import numpy as np
import jax
import jax.numpy as jnp
from jax.experimental import pallas as pl
from jax.experimental.pallas import tpu as pltpu

_HALO = 128  # lane-aligned halo width; requires filter width W - 1 <= 128


def make_filter(order: int, window_size: int) -> np.ndarray:
    """Exact port of DeltaFeature.make_filter (numpy, deterministic)."""
    denom = window_size * (window_size + 1) * (2 * window_size + 1) / 3
    delta = np.arange(-window_size, window_size + 1)
    delta_filters = [np.array([1]), delta]
    delta_next = delta
    for _ in range(order - 1):
        delta_next = np.convolve(delta, delta_next)
        delta_filters.append(delta_next)
    max_len = delta_filters[-1].shape[0]
    padded = []
    for d in delta_filters:
        pad = (max_len - d.shape[0]) // 2
        padded.append(np.pad(d, (pad, pad)))
    filters = np.stack(padded, 0).astype(np.float64)
    filters = filters / np.expand_dims(denom ** np.arange(filters.shape[0]), -1)
    return filters.astype(np.float32)  # (K, W)


def delta_kernel(a2_ref, xc_ref, xh_ref, o_ref):
    # a2_ref: (O, W*C_pad)       folded select+scale matrix (constant block, resident)
    # xc_ref: (1, C_pad, T_TILE) current time tile of the padded input
    # xh_ref: (1, C_pad, HALO)   the 128 columns to the right of this tile
    # o_ref : (1, O, T_TILE)     output tile
    c_pad = xc_ref.shape[1]
    t_tile = xc_ref.shape[2]
    w = a2_ref.shape[1] // c_pad

    # Register-resident slab covering [t0, t0 + T_TILE + HALO): built from two aligned
    # BlockSpec tiles -> no scratch memset, no VMEM->VMEM copy, no unaligned VMEM loads.
    slab = jnp.concatenate([xc_ref[0], xh_ref[0]], axis=1)        # (C_pad, T_TILE+HALO)

    # W shifted windows as value slices of the slab (no VMEM re-reads), stacked along
    # sublanes into the folded MXU operand.  C_pad is a multiple of 8 -> clean tiling.
    staged = jnp.concatenate(
        [slab[:, tau:tau + t_tile] for tau in range(w)], axis=0)  # (W*C_pad, T_TILE)

    # One MXU contraction per tile: single result drain, no loop-carried accumulator.
    o_ref[0] = jnp.dot(
        a2_ref[...], staged,
        preferred_element_type=jnp.float32,
        precision=jax.lax.Precision.HIGHEST,   # exact-f32 path, matches f32 conv1d
    ).astype(o_ref.dtype)


def _round_up(a: int, b: int) -> int:
    return (a + b - 1) // b * b


def _pick_time_tile(T: int, O: int, wcp: int) -> int:
    """Multiple of 128, capped so the largest per-tile panel stays ~128 KiB of f32."""
    t_aligned = _round_up(T, 128)
    budget = 32768                                   # f32 elements (~128 KiB)
    cap = (budget // max(O, wcp)) // 128 * 128
    cap = max(128, min(cap, 1024))
    return min(cap, t_aligned)


def delta_feature(x: jax.Array, order: int = 1, window_size: int = 2) -> jax.Array:
    """x: (B, C, T) float32 -> (B, (order+1)*C, T), matching DeltaFeature.forward."""
    B, C, T = x.shape
    filt = make_filter(order, window_size)           # (K, W), static numpy
    K, W = filt.shape
    assert W % 2 == 1 and W - 1 <= _HALO
    P = (W - 1) // 2
    O = K * C
    C_pad = _round_up(C, 8)
    wcp = W * C_pad

    # Folded "pick source channel o//K, scale by filters[o//C, tau]" matrix:
    # A2[o, tau*C_pad + o//K] = filt[o//C, tau].  Zero columns cover the padded channels
    # (which the wrapper fills with real zeros), so the result is exact.
    A2 = np.zeros((O, wcp), np.float32)
    for o in range(O):
        A2[o, np.arange(W) * C_pad + (o // K)] = filt[o // C]
    A2 = jnp.asarray(A2)

    T_TILE = _pick_time_tile(T, O, wcp)
    T_pad = _round_up(T, T_TILE)
    NT = T_pad // T_TILE
    HB = T_TILE // _HALO                             # halo-block stride in 128-blocks

    # One small XLA pad: channels -> C_pad, time -> [P-wide left halo | x | zeros] of
    # total width T_pad + HALO, so every tile's current + halo blocks are in bounds.
    x_pad = jnp.pad(x, ((0, 0), (0, C_pad - C), (P, T_pad + _HALO - (T + P))))

    # VMEM sized from actual residents (double-buffered blocks + staged operand).
    resident_f32 = (2 * C_pad * T_TILE + 2 * C_pad * _HALO + 2 * O * T_TILE
                    + 2 * O * wcp + 3 * wcp * T_TILE + 2 * C_pad * (T_TILE + _HALO))
    vmem_limit = int(min(100 * 2**20, max(16 * 2**20, 8 * resident_f32)))

    grid_spec = pltpu.PrefetchScalarGridSpec(
        num_scalar_prefetch=0,
        grid=(B, NT),
        in_specs=[
            pl.BlockSpec((O, wcp), lambda b, t: (0, 0)),                # A2, resident
            pl.BlockSpec((1, C_pad, T_TILE), lambda b, t: (b, 0, t)),   # current tile
            pl.BlockSpec((1, C_pad, _HALO),
                         lambda b, t: (b, 0, (t + 1) * HB)),            # right halo
        ],
        out_specs=pl.BlockSpec((1, O, T_TILE), lambda b, t: (b, 0, t)),
    )
    out = pl.pallas_call(
        delta_kernel,
        out_shape=jax.ShapeDtypeStruct((B, O, T_pad), x.dtype),
        grid_spec=grid_spec,
        compiler_params=pltpu.CompilerParams(
            # No cross-grid-step state -> both axes independent (megacore can split either).
            dimension_semantics=("parallel", "parallel"),
            vmem_limit_bytes=vmem_limit),
    )(A2, x_pad, x_pad)
    return out[:, :, :T] if T_pad != T else out


def _reference_np(x: np.ndarray, order: int, window_size: int) -> np.ndarray:
    """Direct numpy emulation of F.conv1d(x, weight, padding, groups=C) as built by the module."""
    filt = make_filter(order, window_size)   # (K, W)
    K, W = filt.shape
    P = (W - 1) // 2
    B, C, T = x.shape
    O = K * C
    xp = np.pad(x, ((0, 0), (0, 0), (P, P)))
    out = np.zeros((B, O, T), np.float32)
    for o in range(O):
        w = filt[o // C]
        src = o // K
        for t in range(T):
            out[:, o, t] = (xp[:, src, t:t + W] * w).sum(-1)
    return out


if __name__ == "__main__":
    # Case 1: module defaults (order=1 -> K=2, W=5), small shape.
    B, C, T = 2, 4, 16
    x = jax.random.normal(jax.random.PRNGKey(0), (B, C, T), dtype=jnp.float32)
    out = jax.block_until_ready(delta_feature(x, order=1, window_size=2))
    ref = _reference_np(np.asarray(x), order=1, window_size=2)
    np.testing.assert_allclose(np.asarray(out), ref, rtol=1e-5, atol=1e-5)

    # Case 2: tiled + ragged-T path (T=600 -> padded to 768, NT=2, sliced back),
    # order=2 (K=3, W=9) and ragged channel count.
    B2, C2, T2 = 2, 3, 600
    x2 = jax.random.normal(jax.random.PRNGKey(1), (B2, C2, T2), dtype=jnp.float32)
    out2 = jax.block_until_ready(delta_feature(x2, order=2, window_size=2))
    ref2 = _reference_np(np.asarray(x2), order=2, window_size=2)
    np.testing.assert_allclose(np.asarray(out2), ref2, rtol=1e-5, atol=1e-5)

    print("KERNEL_OK")
</pallas_src>

<mosaic_0001>
module attributes {stable_mosaic.version = 11 : i64} {
  func.func @delta_kernel(%arg0: i32, %arg1: i32, %arg2: memref<8x40xf32, #tpu.memory_space<vmem>>, %arg3: memref<1x8x128xf32, #tpu.memory_space<vmem>>, %arg4: memref<1x8x128xf32, #tpu.memory_space<vmem>>, %arg5: memref<1x8x128xf32, #tpu.memory_space<vmem>>) attributes {dimension_semantics = [#tpu.dimension_semantics<parallel>, #tpu.dimension_semantics<parallel>], iteration_bounds = array<i64: 2, 1>, scalar_prefetch = 0 : i64, scratch_operands = 0 : i64, tpu.core_type = #tpu.core_type<tc>, window_params = [{pipeline_mode = #tpu.pipeline_mode<synchronous>, transform_indices = @transform_0, window_bounds = array<i64: 8, 40>}, {transform_indices = @transform_1, window_bounds = array<i64: 1, 8, 128>}, {transform_indices = @transform_2, window_bounds = array<i64: 1, 8, 128>}, {transform_indices = @transform_3, window_bounds = array<i64: 1, 8, 128>}]} {
    %c0 = arith.constant 0 : index
    %c0_0 = arith.constant 0 : index
    %c0_1 = arith.constant 0 : index
    %0 = vector.load %arg3[%c0, %c0_0, %c0_1] : memref<1x8x128xf32, #tpu.memory_space<vmem>>, vector<1x8x128xf32>
    %1 = vector.shape_cast %0 : vector<1x8x128xf32> to vector<8x128xf32>
    %c0_2 = arith.constant 0 : index
    %c0_3 = arith.constant 0 : index
    %c0_4 = arith.constant 0 : index
    %2 = vector.load %arg4[%c0_2, %c0_3, %c0_4] : memref<1x8x128xf32, #tpu.memory_space<vmem>>, vector<1x8x128xf32>
    %3 = vector.shape_cast %2 : vector<1x8x128xf32> to vector<8x128xf32>
    %4 = tpu.concatenate %1, %3 in 1 : vector<8x128xf32>, vector<8x128xf32> -> vector<8x256xf32>
    %5 = vector.extract_strided_slice %4 {offsets = [0, 0], sizes = [8, 128], strides = [1, 1]} : vector<8x256xf32> to vector<8x128xf32>
    %6 = vector.extract_strided_slice %4 {offsets = [0, 1], sizes = [8, 128], strides = [1, 1]} : vector<8x256xf32> to vector<8x128xf32>
    %7 = vector.extract_strided_slice %4 {offsets = [0, 2], sizes = [8, 128], strides = [1, 1]} : vector<8x256xf32> to vector<8x128xf32>
    %8 = vector.extract_strided_slice %4 {offsets = [0, 3], sizes = [8, 128], strides = [1, 1]} : vector<8x256xf32> to vector<8x128xf32>
    %9 = vector.extract_strided_slice %4 {offsets = [0, 4], sizes = [8, 128], strides = [1, 1]} : vector<8x256xf32> to vector<8x128xf32>
    %10 = tpu.concatenate %5, %6, %7, %8, %9 in 0 : vector<8x128xf32>, vector<8x128xf32>, vector<8x128xf32>, vector<8x128xf32>, vector<8x128xf32> -> vector<40x128xf32>
    %c0_5 = arith.constant 0 : index
    %c0_6 = arith.constant 0 : index
    %11 = vector.load %arg2[%c0_5, %c0_6] : memref<8x40xf32, #tpu.memory_space<vmem>>, vector<8x40xf32>
    %cst = arith.constant dense<0.000000e+00> : vector<8x128xf32>
    %12 = tpu.matmul %11, %10, %cst {dimension_numbers = #tpu.dot_dimension_numbers<[1], [0], [0], [1], [0, 0, 1, 1], [], []>, precision = #tpu.contract_precision<fp32>} : vector<8x40xf32>, vector<40x128xf32>, vector<8x128xf32> -> vector<8x128xf32>
    %c0_7 = arith.constant 0 : index
    %c0_8 = arith.constant 0 : index
    %c0_9 = arith.constant 0 : index
    %13 = vector.load %arg5[%c0_7, %c0_8, %c0_9] : memref<1x8x128xf32, #tpu.memory_space<vmem>>, vector<1x8x128xf32>
    %14 = vector.shape_cast %13 : vector<1x8x128xf32> to vector<8x128xf32>
    %15 = vector.shape_cast %12 : vector<8x128xf32> to vector<1x8x128xf32>
    tpu.vector_store %arg5[%c0_7, %c0_8, %c0_9], %15 {strides = array<i32>} : memref<1x8x128xf32, #tpu.memory_space<vmem>>, vector<1x8x128xf32>,
    return
  }
  func.func @transform_0(%arg0: i32, %arg1: i32) -> (i32, i32) {
    %c0_i32 = arith.constant 0 : i32
    %c0_i32_0 = arith.constant 0 : i32
    %c0_i32_1 = arith.constant 0 : i32
    return %c0_i32, %c0_i32_0 : i32, i32
  }
  func.func @transform_1(%arg0: i32, %arg1: i32) -> (i32, i32, i32) {
    %c0_i32 = arith.constant 0 : i32
    %c0_i32_0 = arith.constant 0 : i32
    return %arg0, %c0_i32, %arg1 : i32, i32, i32
  }
  func.func @transform_2(%arg0: i32, %arg1: i32) -> (i32, i32, i32) {
    %c1_i32 = arith.constant 1 : i32
    %0 = arith.addi %arg1, %c1_i32 : i32
    %c1_i32_0 = arith.constant 1 : i32
    %1 = arith.muli %0, %c1_i32_0 : i32
    %c0_i32 = arith.constant 0 : i32
    %c0_i32_1 = arith.constant 0 : i32
    return %arg0, %c0_i32, %1 : i32, i32, i32
  }
  func.func @transform_3(%arg0: i32, %arg1: i32) -> (i32, i32, i32) {
    %c0_i32 = arith.constant 0 : i32
    %c0_i32_0 = arith.constant 0 : i32
    return %arg0, %c0_i32, %arg1 : i32, i32, i32
  }
}

</mosaic_0001>

<llo_original>
// kernel: tpu_custom_call.1
$region0: #{tpu_custom_call.1}
  #allocation0 [shape = 'u32[]', space=smem, size = 0x4, offset = 0x4, fixed_abs, tag = 'smem constant byte address 0x4 - core index']
  #allocation1 [shape = 'u32[144,128]{1,0:T(1,128)}', space=vmem, size = 0x12000, scoped, tag = 'internal scratch']
  %s0 = inlined_call_operand.hbm [shape: f32[8,40], index: 0, kind: input, shape index: {}]
  %s1 = inlined_call_operand.hbm [shape: f32[2,8,256], index: 1, kind: input, shape index: {}]
  %s2 = inlined_call_operand.hbm [shape: f32[2,8,256], index: 2, kind: input, shape index: {}]
  %s3 = inlined_call_operand.hbm [shape: f32[2,8,128], index: 3, kind: output, shape index: {}]
  %s4 = sld [smem:[#allocation0]]
  $region57: #{tpu_custom_call.1} parent=0
    _
  %s6 = ssub.s32 1, %s4
  %s7 = scalar_select 0, %s6, %s4
  $region1: #{tpu_custom_call.1} parent=0
    #allocation2 [shape = 'u8[4096]{0}', space=vmem, size = 0x1000, scoped, tag = 'input window, operand 0, single buffered']
    #allocation3 [shape = 's32[2]{0}', space=sflag, size = 0x8, scoped, tag = 'scoped memory for tpu_custom_call.1']
    #allocation4 [shape = 's32[2]{0}', space=sflag, size = 0x8, scoped, tag = 'scoped memory for tpu_custom_call.1']
    #allocation5 [shape = 'u8[8192]{0}', space=vmem, size = 0x2000, scoped, tag = 'input window, operand 1']
    #allocation6 [shape = 's32[2]{0}', space=sflag, size = 0x8, scoped, tag = 'scoped memory for tpu_custom_call.1']
    #allocation7 [shape = 'u8[8192]{0}', space=vmem, size = 0x2000, scoped, tag = 'input window, operand 2']
    #allocation8 [shape = 'u8[8192]{0}', space=vmem, size = 0x2000, scoped, tag = 'output window, operand 0']
    %8 = vsyncpa [#allocation3], 0
    %9 = vsyncpa [#allocation6], 0
    %s10 = scalar_lea.sflag [#allocation6], 1
    %11 = vsyncpa %s10, 0
    %12 = vsyncpa [#allocation4], 0
    %s13 = scalar_lea.sflag [#allocation4], 1
    %14 = vsyncpa %s13, 0
    loop: start=0, step=1, limit=4
    $region2: #{tpu_custom_call.1} parent=1 // loop_pre_header
      _
    $region3: #{tpu_custom_call.1} parent=1 // loop_header
      %s16 = sphi 0, %s20
      %p17 = scmp.ge.s32.totalorder %s16, 4
      %s23 = sphi 0, %s35
      %s24 = sphi 0, %s31
      %s25 = sphi 0, %s23
      %s26 = sphi 0, %s24
      %s27 = sphi 0, %s25
      %s28 = sphi 0, %s26
      %s36 = sphi 0, %s36
      %s38 = sphi 0, %s36
      %s39 = sphi 0, %s38
      %s53 = sphi 0, %s39
      %s61 = sphi 0, %s63
      %s64 = sphi 0, %s61
      %s65 = sphi 0, %s64
      %s81 = sphi 0, %s65
      %s91 = sphi 0, %s93
      %s94 = sphi 0, %s91
      %s95 = sphi 0, %s94
      %s111 = sphi 0, %s95
      %s119 = sphi 0, %s121
      %s122 = sphi 0, %s119
      %s123 = sphi 0, %s122
      %s139 = sphi 0, %s123
    $region4: #{tpu_custom_call.1} parent=1 // loop_header_branch
      %19 = sbr.rel (%p17) target = $region8
    $region5: #{tpu_custom_call.1} parent=1 // loop_body
      %s21 = ssub.s32 %s16, 1
      %s22 = ssub.s32 %s16, 2
      %s29 = sadd.s32 1, %s24
      %p30 = scmp.ge.s32.totalorder %s29, 1
      %s31 = scalar_select %p30, 0, %s29
      %s32 = sadd.s32 1, %s23
      %s33 = scalar_select %p30, %s32, %s23
      %p34 = scmp.ge.s32.totalorder %s33, 2
      %s35 = scalar_select %p34, 0, %s33
      %s37 = sadd.s32 %s36, 1
      %p40 = scmp.eq.s32.totalorder %s16, 1
      %p41 = scmp.ne.s32.totalorder %s36, %s38
      %p42 = scmp.eq.s32.totalorder %s16, 0
      %p43 = por %p41, %p42
      %p44 = scmp.ne.s32.totalorder %s36, %s38
      %p45 = scmp.eq.s32.totalorder %s21, 1
      %p46 = por %p44, %p45
      %p47 = scmp.ne.s32.totalorder %s38, %s39
      %p48 = scmp.eq.s32.totalorder %s21, 0
      %p49 = por %p47, %p48
      %p50 = scmp.ne.s32.totalorder %s38, %s39
      %p51 = scmp.eq.s32.totalorder %s22, 1
      %p52 = por %p50, %p51
      %p54 = scmp.ne.s32.totalorder %s39, %s53
      %p55 = scmp.eq.s32.totalorder %s22, 0
      %p56 = por %p54, %p55
      %s57 = ssub.s32 %s23, %s35
      %s58 = ssub.s32 %s24, %s31
      %s59 = sor.u32 %s57, %s58
      %p60 = scmp.eq.s32.totalorder %s59, 0
      %s62 = sadd.s32 %s61, 1
      %s63 = scalar_select %p60, %s61, %s62
      %p66 = pneg %p60
      %p67 = scmp.eq.s32.totalorder %s16, 1
      %p68 = por %p66, %p67
      %p69 = scmp.ne.s32.totalorder %s61, %s64
      %p70 = scmp.eq.s32.totalorder %s16, 0
      %p71 = por %p69, %p70
      %p72 = scmp.ne.s32.totalorder %s61, %s64
      %p73 = scmp.eq.s32.totalorder %s21, 1
      %p74 = por %p72, %p73
      %p75 = scmp.ne.s32.totalorder %s64, %s65
      %p76 = scmp.eq.s32.totalorder %s21, 0
      %p77 = por %p75, %p76
      %p78 = scmp.ne.s32.totalorder %s64, %s65
      %p79 = scmp.eq.s32.totalorder %s22, 1
      %p80 = por %p78, %p79
      %p82 = scmp.ne.s32.totalorder %s65, %s81
      %p83 = scmp.eq.s32.totalorder %s22, 0
      %p84 = por %p82, %p83
      %s85 = sadd.s32 %s24, 1
      %s86 = sadd.s32 %s31, 1
      %s87 = ssub.s32 %s23, %s35
      %s88 = ssub.s32 %s85, %s86
      %s89 = sor.u32 %s87, %s88
      %p90 = scmp.eq.s32.totalorder %s89, 0
      %s92 = sadd.s32 %s91, 1
      %s93 = scalar_select %p90, %s91, %s92
      %p96 = pneg %p90
      %p97 = scmp.eq.s32.totalorder %s16, 1
      %p98 = por %p96, %p97
      %p99 = scmp.ne.s32.totalorder %s91, %s94
      %p100 = scmp.eq.s32.totalorder %s16, 0
      %p101 = por %p99, %p100
      %p102 = scmp.ne.s32.totalorder %s91, %s94
      %p103 = scmp.eq.s32.totalorder %s21, 1
      %p104 = por %p102, %p103
      %p105 = scmp.ne.s32.totalorder %s94, %s95
      %p106 = scmp.eq.s32.totalorder %s21, 0
      %p107 = por %p105, %p106
      %p108 = scmp.ne.s32.totalorder %s94, %s95
      %p109 = scmp.eq.s32.totalorder %s22, 1
      %p110 = por %p108, %p109
      %p112 = scmp.ne.s32.totalorder %s95, %s111
      %p113 = scmp.eq.s32.totalorder %s22, 0
      %p114 = por %p112, %p113
      %s115 = ssub.s32 %s23, %s35
      %s116 = ssub.s32 %s24, %s31
      %s117 = sor.u32 %s115, %s116
      %p118 = scmp.eq.s32.totalorder %s117, 0
      %s120 = sadd.s32 %s119, 1
      %s121 = scalar_select %p118, %s119, %s120
      %p124 = pneg %p118
      %p125 = scmp.eq.s32.totalorder %s16, 1
      %p126 = por %p124, %p125
      %p127 = scmp.ne.s32.totalorder %s119, %s122
      %p128 = scmp.eq.s32.totalorder %s16, 0
      %p129 = por %p127, %p128
      %p130 = scmp.ne.s32.totalorder %s119, %s122
      %p131 = scmp.eq.s32.totalorder %s21, 1
      %p132 = por %p130, %p131
      %p133 = scmp.ne.s32.totalorder %s122, %s123
      %p134 = scmp.eq.s32.totalorder %s21, 0
      %p135 = por %p133, %p134
      %p136 = scmp.ne.s32.totalorder %s122, %s123
      %p137 = scmp.eq.s32.totalorder %s22, 1
      %p138 = por %p136, %p137
      %p140 = scmp.ne.s32.totalorder %s123, %s139
      %p141 = scmp.eq.s32.totalorder %s22, 0
      %p142 = por %p140, %p141
      %p143 = scmp.le.s32.totalorder 1, %s16
      %p144 = scmp.lt.s32.totalorder %s16, 3
      %p145 = pnand %p143, %p144
      %p146 = pneg %p145
      // Predicated region
      $region9: #{tpu_custom_call.1} parent=5 // pred_check
        _
      $region10: #{tpu_custom_call.1} parent=5 // pred_check_branch
        %148 = sbr.rel (%p145) target = $region12
      $region11: #{tpu_custom_call.1} parent=5 // pred_region
        %s149 = ssub.s32 %s16, 1
        // Predicated region
        $region13: #{tpu_custom_call.1} parent=11 // pred_check
          %p150 = pneg %p49
        $region14: #{tpu_custom_call.1} parent=11 // pred_check_branch
          %152 = sbr.rel (%p150) target = $region16
        $region15: #{tpu_custom_call.1} parent=11 // pred_region
          %s154 = ssub.s32 128, 128
          %155 = vsyncadd [#allocation3], %s154
          %s157 = sshll.u32 [#allocation2], 4
          %s158 = int_to_ptr.vmem [resolvable:$true] %s157
          %160 = dma.hbm_to_vmem [thread:$0]  %s0, 128, %s158, [#allocation3]
        $region16: #{tpu_custom_call.1} parent=11 // pred_fallthru
          _
      $region12: #{tpu_custom_call.1} parent=5 // pred_fallthru
        _
      %p161 = scmp.lt.s32.totalorder %s16, 2
      // Predicated region
      $region17: #{tpu_custom_call.1} parent=5 // pred_check
        %p162 = pneg %p161
      $region18: #{tpu_custom_call.1} parent=5 // pred_check_branch
        %164 = sbr.rel (%p162) target = $region20
      $region19: #{tpu_custom_call.1} parent=5 // pred_region
        // Predicated region
        $region21: #{tpu_custom_call.1} parent=19 // pred_check
          %p165 = pneg %p71
        $region22: #{tpu_custom_call.1} parent=19 // pred_check_branch
          %167 = sbr.rel (%p165) target = $region24
        $region23: #{tpu_custom_call.1} parent=19 // pred_region
          %s168 = sand.u32 %s16, 1
          %s169 = scalar_lea.sflag [#allocation6], %s168
          %s170 = sand.u32 %s61, 1
          %s171 = smul.addr %s170, 8
          %s172 = scalar_lea.vmem [#allocation5], %s171
          %s174 = ssub.s32 128, 128
          %175 = vsyncadd %s169, %s174
          %s176 = smul.addr %s23, 2
          %s177 = sadd.s32 %s24, %s176
          %s178 = smul.addr %s177, 128
          %s179 = scalar_lea.hbm %s1, %s178
          %s181 = sshll.u32 %s172, 4
          %s182 = int_to_ptr.vmem [resolvable:$true] %s181
          %184 = dma.hbm_to_vmem [thread:$0]  %s179, 128, %s182, %s169
        $region24: #{tpu_custom_call.1} parent=19 // pred_fallthru
          _
        // Predicated region
        $region25: #{tpu_custom_call.1} parent=19 // pred_check
          %p185 = pneg %p101
        $region26: #{tpu_custom_call.1} parent=19 // pred_check_branch
          %187 = sbr.rel (%p185) target = $region28
        $region27: #{tpu_custom_call.1} parent=19 // pred_region
          %s188 = sand.u32 %s16, 1
          %s189 = scalar_lea.sflag [#allocation6], %s188
          %s190 = sand.u32 %s91, 1
          %s191 = smul.addr %s190, 8
          %s192 = scalar_lea.vmem [#allocation7], %s191
          %s193 = sadd.s32 %s24, 1
          %s195 = ssub.s32 128, 128
          %196 = vsyncadd %s189, %s195
          %s197 = smul.addr %s23, 2
          %s198 = sadd.s32 %s193, %s197
          %s199 = smul.addr %s198, 128
          %s200 = scalar_lea.hbm %s2, %s199
          %s202 = sshll.u32 %s192, 4
          %s203 = int_to_ptr.vmem [resolvable:$true] %s202
          %205 = dma.hbm_to_vmem [thread:$0]  %s200, 128, %s203, %s189
        $region28: #{tpu_custom_call.1} parent=19 // pred_fallthru
          _
      $region20: #{tpu_custom_call.1} parent=5 // pred_fallthru
        _
      %p206 = scmp.le.s32.totalorder 1, %s16
      %p207 = scmp.lt.s32.totalorder %s16, 3
      %p208 = pnand %p206, %p207
      %p209 = pneg %p208
      // Predicated region
      $region29: #{tpu_custom_call.1} parent=5 // pred_check
        _
      $region30: #{tpu_custom_call.1} parent=5 // pred_check_branch
        %211 = sbr.rel (%p208) target = $region32
      $region31: #{tpu_custom_call.1} parent=5 // pred_region
        %s212 = ssub.s32 %s16, 1
        // Predicated region
        $region33: #{tpu_custom_call.1} parent=31 // pred_check
          %p213 = pneg %p49
        $region34: #{tpu_custom_call.1} parent=31 // pred_check_branch
          %215 = sbr.rel (%p213) target = $region36
        $region35: #{tpu_custom_call.1} parent=31 // pred_region
          %216 = dma.done [#allocation3], 128
        $region36: #{tpu_custom_call.1} parent=31 // pred_fallthru
          _
        %s217 = sand.u32 %s21, 1
        %s218 = scalar_lea.sflag [#allocation6], %s217
        %s219 = sand.u32 %s64, 1
        %s220 = smul.addr %s219, 8
        %s221 = scalar_lea.vmem [#allocation5], %s220
        // Predicated region
        $region37: #{tpu_custom_call.1} parent=31 // pred_check
          %p222 = pneg %p77
        $region38: #{tpu_custom_call.1} parent=31 // pred_check_branch
          %224 = sbr.rel (%p222) target = $region40
        $region39: #{tpu_custom_call.1} parent=31 // pred_region
          %225 = dma.done %s218, 128
        $region40: #{tpu_custom_call.1} parent=31 // pred_fallthru
          _
        %s226 = sand.u32 %s21, 1
        %s227 = scalar_lea.sflag [#allocation6], %s226
        %s228 = sand.u32 %s94, 1
        %s229 = smul.addr %s228, 8
        %s230 = scalar_lea.vmem [#allocation7], %s229
        // Predicated region
        $region41: #{tpu_custom_call.1} parent=31 // pred_check
          %p231 = pneg %p107
        $region42: #{tpu_custom_call.1} parent=31 // pred_check_branch
          %233 = sbr.rel (%p231) target = $region44
        $region43: #{tpu_custom_call.1} parent=31 // pred_region
          %234 = dma.done %s227, 128
        $region44: #{tpu_custom_call.1} parent=31 // pred_fallthru
          _
        %p235 = pneg %p49
        %p236 = pneg %p46
        %s237 = sand.u32 %s21, 1
        %s238 = scalar_lea.sflag [#allocation6], %s237
        %s239 = sand.u32 %s64, 1
        %s240 = smul.addr %s239, 8
        %s241 = scalar_lea.vmem [#allocation5], %s240
        %p242 = pneg %p77
        %p243 = pneg %p74
        %s244 = sand.u32 %s21, 1
        %s245 = scalar_lea.sflag [#allocation6], %s244
        %s246 = sand.u32 %s94, 1
        %s247 = smul.addr %s246, 8
        %s248 = scalar_lea.vmem [#allocation7], %s247
        %p249 = pneg %p107
        %p250 = pneg %p104
        %p251 = pneg %p135
        %p252 = pneg %p132
        %s253 = sand.u32 %s122, 1
        %s254 = scalar_lea.sflag [#allocation4], %s253
        %s255 = sand.u32 %s122, 1
        %s256 = smul.addr %s255, 8
        %s257 = scalar_lea.vmem [#allocation8], %s256
        %s258 = sadd.s32 %s26, 1
        %v259 = vld [vmem:[%s221] sm:$0xff]
        %v260 = vld [vmem:[%s230] sm:$0xff]
        %263 = vrot.lane.b32.xlu0 %v259, 127
        %v264 = vpop.permute.xlu0 %263
        %265 = vrot.lane.b32.xlu0 %v260, 127
        %v266 = vpop.permute.xlu0 %265
        %vm267 = vcmask 1039360
        %v268 = vsel %vm267, %v264, %v266
        %270 = vrot.lane.b32.xlu0 %v259, 126
        %v271 = vpop.permute.xlu0 %270
        %272 = vrot.lane.b32.xlu0 %v260, 126
        %v273 = vpop.permute.xlu0 %272
        %vm274 = vcmask 1031168
        %v275 = vsel %vm274, %v271, %v273
        %277 = vrot.lane.b32.xlu0 %v259, 125
        %v278 = vpop.permute.xlu0 %277
        %279 = vrot.lane.b32.xlu0 %v260, 125
        %v280 = vpop.permute.xlu0 %279
        %vm281 = vcmask 1022976
        %v282 = vsel %vm281, %v278, %v280
        %284 = vrot.lane.b32.xlu0 %v259, 124
        %v285 = vpop.permute.xlu0 %284
        %286 = vrot.lane.b32.xlu0 %v260, 124
        %v287 = vpop.permute.xlu0 %286
        %vm288 = vcmask 1014784
        %v289 = vsel %vm288, %v285, %v287
        %v291 = vld [vmem:[#allocation2] sm:$0xff]
        %vm292 = vcmask 326656
        %v294 = vsel %vm292, %v291, 0
        %296 = vmatprep.subr.mxu0 0.0
        %v297 = vand.u32 %v259, 4294901760
        %298 = vmatpush1.msra.mxu0 %v297
        %299 = vmatprep.subr.mxu0 0.0
        %v300 = vand.u32 %v268, 4294901760
        %301 = vmatpush1.msra.mxu0 %v300
        %302 = vmatprep.subr.mxu0 0.0
        %v303 = vand.u32 %v275, 4294901760
        %304 = vmatpush1.msra.mxu0 %v303
        %305 = vmatprep.subr.mxu0 0.0
        %v306 = vand.u32 %v282, 4294901760
        %307 = vmatpush1.msra.mxu0 %v306
        %308 = vmatprep.subr.mxu0 0.0
        %v309 = vand.u32 %v289, 4294901760
        %310 = vmatpush1.msra.mxu0 %v309
        %311 = vmatprep.subr.mxu0 0.0
        %312 = vmatpush1.msra.mxu0 0.0
        %313 = vmatprep.subr.mxu0 0.0
        %314 = vmatpush1.msra.mxu0 0.0
        %315 = vmatprep.subr.mxu0 0.0
        %316 = vmatpush1.msra.mxu0 0.0
        %317 = vmatprep.subr.mxu0 0.0
        %318 = vmatpush1.msra.mxu0 0.0
        %319 = vmatprep.subr.mxu0 0.0
        %320 = vmatpush1.msra.mxu0 0.0
        %321 = vmatprep.subr.mxu0 0.0
        %322 = vmatpush1.msra.mxu0 0.0
        %323 = vmatprep.subr.mxu0 0.0
        %324 = vmatpush1.msra.mxu0 0.0
        %325 = vmatprep.subr.mxu0 0.0
        %326 = vmatpush1.msra.mxu0 0.0
        %327 = vmatprep.subr.mxu0 0.0
        %328 = vmatpush1.msra.mxu0 0.0
        %329 = vmatprep.subr.mxu0 0.0
        %330 = vmatpush1.msra.mxu0 0.0
        %331 = vmatprep.subr.mxu0 0.0
        %332 = vmatpush1.msra.mxu0 0.0
        %333 = vmatprep.subr.mxu0 0.0
        %334 = vmatpush1.msra.mxu0 0.0
        %335 = vmatprep.subr.mxu0 0.0
        %336 = vmatpush1.msra.mxu0 0.0
        %337 = vmatprep.subr.mxu0 0.0
        %338 = vmatpush1.msra.mxu0 0.0
        %339 = vmatprep.subr.mxu0 0.0
        %340 = vmatpush1.msra.mxu0 0.0
        %341 = vmatprep.subr.mxu0 0.0
        %342 = vmatpush1.msra.mxu0 0.0
        %343 = vmatprep.subr.mxu0 0.0
        %344 = vmatpush1.msra.mxu0 0.0
        %345 = vmatprep.subr.mxu0 0.0
        %346 = vmatpush1.msra.mxu0 0.0
        %347 = vmatprep.subr.mxu0 0.0
        %348 = vmatpush1.msra.mxu0 0.0
        %349 = vmatprep.subr.mxu0 0.0
        %350 = vmatpush1.msra.mxu0 0.0
        %351 = vmatprep.subr.mxu0 0.0
        %352 = vmatpush1.msra.mxu0 0.0
        %353 = vmatprep.subr.mxu0 0.0
        %354 = vmatpush1.msra.mxu0 0.0
        %355 = vmatprep.subr.mxu0 0.0
        %356 = vmatpush1.msra.mxu0 0.0
        %357 = vmatprep.subr.mxu0 0.0
        %358 = vmatpush1.msra.mxu0 0.0
        %359 = vmatprep.subr.mxu0 0.0
        %360 = vmatpush1.msra.mxu0 0.0
        %361 = vmatprep.subr.mxu0 0.0
        %362 = vmatpush1.msra.mxu0 0.0
        %363 = vmatprep.subr.mxu0 0.0
        %364 = vmatpush1.msra.mxu0 0.0
        %365 = vmatprep.mubr.f32.mxu0 0.0
        %v366 = vand.u32 %v294, 4294901760
        %v367 = vsub.f32 %v294, %v366
        %v368 = vand.u32 %v367, 4294901760
        %v369 = vsub.f32 %v367, %v368
        %v370 = vand.u32 %v369, 4294901760
        %371 = vmatmul.mubr.f32.gmra.mrb[0].mxu0 %v370
        %v372 = vpop.f32.mrb[0].mxu0
        %v373 = vadd.f32 0.0, %v372
        %v374 = vpop.f32.mrb[0].mxu0
        %375 = vdwg.mxu0
        %376 = vmatprep.subr.mxu0 0.0
        %v377 = vand.u32 %v259, 4294901760
        %v378 = vsub.f32 %v259, %v377
        %v379 = vand.u32 %v378, 4294901760
        %v380 = vsub.f32 %v378, %v379
        %v381 = vand.u32 %v380, 4294901760
        %382 = vmatpush1.msra.mxu0 %v381
        %383 = vmatprep.subr.mxu0 0.0
        %v384 = vand.u32 %v268, 4294901760
        %v385 = vsub.f32 %v268, %v384
        %v386 = vand.u32 %v385, 4294901760
        %v387 = vsub.f32 %v385, %v386
        %v388 = vand.u32 %v387, 4294901760
        %389 = vmatpush1.msra.mxu0 %v388
        %390 = vmatprep.subr.mxu0 0.0
        %v391 = vand.u32 %v275, 4294901760
        %v392 = vsub.f32 %v275, %v391
        %v393 = vand.u32 %v392, 4294901760
        %v394 = vsub.f32 %v392, %v393
        %v395 = vand.u32 %v394, 4294901760
        %396 = vmatpush1.msra.mxu0 %v395
        %397 = vmatprep.subr.mxu0 0.0
        %v398 = vand.u32 %v282, 4294901760
        %v399 = vsub.f32 %v282, %v398
        %v400 = vand.u32 %v399, 4294901760
        %v401 = vsub.f32 %v399, %v400
        %v402 = vand.u32 %v401, 4294901760
        %403 = vmatpush1.msra.mxu0 %v402
        %404 = vmatprep.subr.mxu0 0.0
        %v405 = vand.u32 %v289, 4294901760
        %v406 = vsub.f32 %v289, %v405
        %v407 = vand.u32 %v406, 4294901760
        %v408 = vsub.f32 %v406, %v407
        %v409 = vand.u32 %v408, 4294901760
        %410 = vmatpush1.msra.mxu0 %v409
        %411 = vmatprep.subr.mxu0 0.0
        %412 = vmatpush1.msra.mxu0 0.0
        %413 = vmatprep.subr.mxu0 0.0
        %414 = vmatpush1.msra.mxu0 0.0
        %415 = vmatprep.subr.mxu0 0.0
        %416 = vmatpush1.msra.mxu0 0.0
        %417 = vmatprep.subr.mxu0 0.0
        %418 = vmatpush1.msra.mxu0 0.0
        %419 = vmatprep.subr.mxu0 0.0
        %420 = vmatpush1.msra.mxu0 0.0
        %421 = vmatprep.subr.mxu0 0.0
        %422 = vmatpush1.msra.mxu0 0.0
        %423 = vmatprep.subr.mxu0 0.0
        %424 = vmatpush1.msra.mxu0 0.0
        %425 = vmatprep.subr.mxu0 0.0
        %426 = vmatpush1.msra.mxu0 0.0
        %427 = vmatprep.subr.mxu0 0.0
        %428 = vmatpush1.msra.mxu0 0.0
        %429 = vmatprep.subr.mxu0 0.0
        %430 = vmatpush1.msra.mxu0 0.0
        %431 = vmatprep.subr.mxu0 0.0
        %432 = vmatpush1.msra.mxu0 0.0
        %433 = vmatprep.subr.mxu0 0.0
        %434 = vmatpush1.msra.mxu0 0.0
        %435 = vmatprep.subr.mxu0 0.0
        %436 = vmatpush1.msra.mxu0 0.0
        %437 = vmatprep.subr.mxu0 0.0
        %438 = vmatpush1.msra.mxu0 0.0
        %439 = vmatprep.subr.mxu0 0.0
        %440 = vmatpush1.msra.mxu0 0.0
        %441 = vmatprep.subr.mxu0 0.0
        %442 = vmatpush1.msra.mxu0 0.0
        %443 = vmatprep.subr.mxu0 0.0
        %444 = vmatpush1.msra.mxu0 0.0
        %445 = vmatprep.subr.mxu0 0.0
        %446 = vmatpush1.msra.mxu0 0.0
        %447 = vmatprep.subr.mxu0 0.0
        %448 = vmatpush1.msra.mxu0 0.0
        %449 = vmatprep.subr.mxu0 0.0
        %450 = vmatpush1.msra.mxu0 0.0
        %451 = vmatprep.subr.mxu0 0.0
        %452 = vmatpush1.msra.mxu0 0.0
        %453 = vmatprep.subr.mxu0 0.0
        %454 = vmatpush1.msra.mxu0 0.0
        %455 = vmatprep.subr.mxu0 0.0
        %456 = vmatpush1.msra.mxu0 0.0
        %457 = vmatprep.subr.mxu0 0.0
        %458 = vmatpush1.msra.mxu0 0.0
        %459 = vmatprep.subr.mxu0 0.0
        %460 = vmatpush1.msra.mxu0 0.0
        %461 = vmatprep.subr.mxu0 0.0
        %462 = vmatpush1.msra.mxu0 0.0
        %463 = vmatprep.subr.mxu0 0.0
        %464 = vmatpush1.msra.mxu0 0.0
        %465 = vmatprep.mubr.f32.mxu0 0.0
        %v466 = vand.u32 %v294, 4294901760
        %467 = vmatmul.mubr.f32.gmra.mrb[0].mxu0 %v466
        %v468 = vpop.f32.mrb[0].mxu0
        %v469 = vadd.f32 %v373, %v468
        %v470 = vpop.f32.mrb[0].mxu0
        %471 = vdwg.mxu0
        %472 = vmatprep.subr.mxu0 0.0
        %v473 = vand.u32 %v259, 4294901760
        %v474 = vsub.f32 %v259, %v473
        %475 = vmatpush1.msra.mxu0 %v474
        %476 = vmatprep.subr.mxu0 0.0
        %v477 = vand.u32 %v268, 4294901760
        %v478 = vsub.f32 %v268, %v477
        %479 = vmatpush1.msra.mxu0 %v478
        %480 = vmatprep.subr.mxu0 0.0
        %v481 = vand.u32 %v275, 4294901760
        %v482 = vsub.f32 %v275, %v481
        %483 = vmatpush1.msra.mxu0 %v482
        %484 = vmatprep.subr.mxu0 0.0
        %v485 = vand.u32 %v282, 4294901760
        %v486 = vsub.f32 %v282, %v485
        %487 = vmatpush1.msra.mxu0 %v486
        %488 = vmatprep.subr.mxu0 0.0
        %v489 = vand.u32 %v289, 4294901760
        %v490 = vsub.f32 %v289, %v489
        %491 = vmatpush1.msra.mxu0 %v490
        %492 = vmatprep.subr.mxu0 0.0
        %493 = vmatpush1.msra.mxu0 0.0
        %494 = vmatprep.subr.mxu0 0.0
        %495 = vmatpush1.msra.mxu0 0.0
        %496 = vmatprep.subr.mxu0 0.0
        %497 = vmatpush1.msra.mxu0 0.0
        %498 = vmatprep.subr.mxu0 0.0
        %499 = vmatpush1.msra.mxu0 0.0
        %500 = vmatprep.subr.mxu0 0.0
        %501 = vmatpush1.msra.mxu0 0.0
        %502 = vmatprep.subr.mxu0 0.0
        %503 = vmatpush1.msra.mxu0 0.0
        %504 = vmatprep.subr.mxu0 0.0
        %505 = vmatpush1.msra.mxu0 0.0
        %506 = vmatprep.subr.mxu0 0.0
        %507 = vmatpush1.msra.mxu0 0.0
        %508 = vmatprep.subr.mxu0 0.0
        %509 = vmatpush1.msra.mxu0 0.0
        %510 = vmatprep.subr.mxu0 0.0
        %511 = vmatpush1.msra.mxu0 0.0
        %512 = vmatprep.subr.mxu0 0.0
        %513 = vmatpush1.msra.mxu0 0.0
        %514 = vmatprep.subr.mxu0 0.0
        %515 = vmatpush1.msra.mxu0 0.0
        %516 = vmatprep.subr.mxu0 0.0
        %517 = vmatpush1.msra.mxu0 0.0
        %518 = vmatprep.subr.mxu0 0.0
        %519 = vmatpush1.msra.mxu0 0.0
        %520 = vmatprep.subr.mxu0 0.0
        %521 = vmatpush1.msra.mxu0 0.0
        %522 = vmatprep.subr.mxu0 0.0
        %523 = vmatpush1.msra.mxu0 0.0
        %524 = vmatprep.subr.mxu0 0.0
        %525 = vmatpush1.msra.mxu0 0.0
        %526 = vmatprep.subr.mxu0 0.0
        %527 = vmatpush1.msra.mxu0 0.0
        %528 = vmatprep.subr.mxu0 0.0
        %529 = vmatpush1.msra.mxu0 0.0
        %530 = vmatprep.subr.mxu0 0.0
        %531 = vmatpush1.msra.mxu0 0.0
        %532 = vmatprep.subr.mxu0 0.0
        %533 = vmatpush1.msra.mxu0 0.0
        %534 = vmatprep.subr.mxu0 0.0
        %535 = vmatpush1.msra.mxu0 0.0
        %536 = vmatprep.subr.mxu0 0.0
        %537 = vmatpush1.msra.mxu0 0.0
        %538 = vmatprep.subr.mxu0 0.0
        %539 = vmatpush1.msra.mxu0 0.0
        %540 = vmatprep.subr.mxu0 0.0
        %541 = vmatpush1.msra.mxu0 0.0
        %542 = vmatprep.subr.mxu0 0.0
        %543 = vmatpush1.msra.mxu0 0.0
        %544 = vmatprep.subr.mxu0 0.0
        %545 = vmatpush1.msra.mxu0 0.0
        %546 = vmatprep.mubr.f32.mxu0 0.0
        %v547 = vand.u32 %v294, 4294901760
        %v548 = vsub.f32 %v294, %v547
        %549 = vmatmul.mubr.f32.gmra.mrb[0].mxu0 %v548
        %v550 = vpop.f32.mrb[0].mxu0
        %v551 = vadd.f32 %v469, %v550
        %v552 = vpop.f32.mrb[0].mxu0
        %553 = vdwg.mxu0
        %554 = vmatprep.subr.mxu0 0.0
        %v555 = vand.u32 %v259, 4294901760
        %556 = vmatpush1.msra.mxu0 %v555
        %557 = vmatprep.subr.mxu0 0.0
        %v558 = vand.u32 %v268, 4294901760
        %559 = vmatpush1.msra.mxu0 %v558
        %560 = vmatprep.subr.mxu0 0.0
        %v561 = vand.u32 %v275, 4294901760
        %562 = vmatpush1.msra.mxu0 %v561
        %563 = vmatprep.subr.mxu0 0.0
        %v564 = vand.u32 %v282, 4294901760
        %565 = vmatpush1.msra.mxu0 %v564
        %566 = vmatprep.subr.mxu0 0.0
        %v567 = vand.u32 %v289, 4294901760
        %568 = vmatpush1.msra.mxu0 %v567
        %569 = vmatprep.subr.mxu0 0.0
        %570 = vmatpush1.msra.mxu0 0.0
        %571 = vmatprep.subr.mxu0 0.0
        %572 = vmatpush1.msra.mxu0 0.0
        %573 = vmatprep.subr.mxu0 0.0
        %574 = vmatpush1.msra.mxu0 0.0
        %575 = vmatprep.subr.mxu0 0.0
        %576 = vmatpush1.msra.mxu0 0.0
        %577 = vmatprep.subr.mxu0 0.0
        %578 = vmatpush1.msra.mxu0 0.0
        %579 = vmatprep.subr.mxu0 0.0
        %580 = vmatpush1.msra.mxu0 0.0
        %581 = vmatprep.subr.mxu0 0.0
        %582 = vmatpush1.msra.mxu0 0.0
        %583 = vmatprep.subr.mxu0 0.0
        %584 = vmatpush1.msra.mxu0 0.0
        %585 = vmatprep.subr.mxu0 0.0
        %586 = vmatpush1.msra.mxu0 0.0
        %587 = vmatprep.subr.mxu0 0.0
        %588 = vmatpush1.msra.mxu0 0.0
        %589 = vmatprep.subr.mxu0 0.0
        %590 = vmatpush1.msra.mxu0 0.0
        %591 = vmatprep.subr.mxu0 0.0
        %592 = vmatpush1.msra.mxu0 0.0
        %593 = vmatprep.subr.mxu0 0.0
        %594 = vmatpush1.msra.mxu0 0.0
        %595 = vmatprep.subr.mxu0 0.0
        %596 = vmatpush1.msra.mxu0 0.0
        %597 = vmatprep.subr.mxu0 0.0
        %598 = vmatpush1.msra.mxu0 0.0
        %599 = vmatprep.subr.mxu0 0.0
        %600 = vmatpush1.msra.mxu0 0.0
        %601 = vmatprep.subr.mxu0 0.0
        %602 = vmatpush1.msra.mxu0 0.0
        %603 = vmatprep.subr.mxu0 0.0
        %604 = vmatpush1.msra.mxu0 0.0
        %605 = vmatprep.subr.mxu0 0.0
        %606 = vmatpush1.msra.mxu0 0.0
        %607 = vmatprep.subr.mxu0 0.0
        %608 = vmatpush1.msra.mxu0 0.0
        %609 = vmatprep.subr.mxu0 0.0
        %610 = vmatpush1.msra.mxu0 0.0
        %611 = vmatprep.subr.mxu0 0.0
        %612 = vmatpush1.msra.mxu0 0.0
        %613 = vmatprep.subr.mxu0 0.0
        %614 = vmatpush1.msra.mxu0 0.0
        %615 = vmatprep.subr.mxu0 0.0
        %616 = vmatpush1.msra.mxu0 0.0
        %617 = vmatprep.subr.mxu0 0.0
        %618 = vmatpush1.msra.mxu0 0.0
        %619 = vmatprep.subr.mxu0 0.0
        %620 = vmatpush1.msra.mxu0 0.0
        %621 = vmatprep.subr.mxu0 0.0
        %622 = vmatpush1.msra.mxu0 0.0
        %623 = vmatprep.mubr.f32.mxu0 0.0
        %v624 = vand.u32 %v294, 4294901760
        %v625 = vsub.f32 %v294, %v624
        %v626 = vand.u32 %v625, 4294901760
        %627 = vmatmul.mubr.f32.gmra.mrb[0].mxu0 %v626
        %v628 = vpop.f32.mrb[0].mxu0
        %v629 = vadd.f32 %v551, %v628
        %v630 = vpop.f32.mrb[0].mxu0
        %631 = vdwg.mxu0
        %632 = vmatprep.subr.mxu0 0.0
        %v633 = vand.u32 %v259, 4294901760
        %v634 = vsub.f32 %v259, %v633
        %v635 = vand.u32 %v634, 4294901760
        %636 = vmatpush1.msra.mxu0 %v635
        %637 = vmatprep.subr.mxu0 0.0
        %v638 = vand.u32 %v268, 4294901760
        %v639 = vsub.f32 %v268, %v638
        %v640 = vand.u32 %v639, 4294901760
        %641 = vmatpush1.msra.mxu0 %v640
        %642 = vmatprep.subr.mxu0 0.0
        %v643 = vand.u32 %v275, 4294901760
        %v644 = vsub.f32 %v275, %v643
        %v645 = vand.u32 %v644, 4294901760
        %646 = vmatpush1.msra.mxu0 %v645
        %647 = vmatprep.subr.mxu0 0.0
        %v648 = vand.u32 %v282, 4294901760
        %v649 = vsub.f32 %v282, %v648
        %v650 = vand.u32 %v649, 4294901760
        %651 = vmatpush1.msra.mxu0 %v650
        %652 = vmatprep.subr.mxu0 0.0
        %v653 = vand.u32 %v289, 4294901760
        %v654 = vsub.f32 %v289, %v653
        %v655 = vand.u32 %v654, 4294901760
        %656 = vmatpush1.msra.mxu0 %v655
        %657 = vmatprep.subr.mxu0 0.0
        %658 = vmatpush1.msra.mxu0 0.0
        %659 = vmatprep.subr.mxu0 0.0
        %660 = vmatpush1.msra.mxu0 0.0
        %661 = vmatprep.subr.mxu0 0.0
        %662 = vmatpush1.msra.mxu0 0.0
        %663 = vmatprep.subr.mxu0 0.0
        %664 = vmatpush1.msra.mxu0 0.0
        %665 = vmatprep.subr.mxu0 0.0
        %666 = vmatpush1.msra.mxu0 0.0
        %667 = vmatprep.subr.mxu0 0.0
        %668 = vmatpush1.msra.mxu0 0.0
        %669 = vmatprep.subr.mxu0 0.0
        %670 = vmatpush1.msra.mxu0 0.0
        %671 = vmatprep.subr.mxu0 0.0
        %672 = vmatpush1.msra.mxu0 0.0
        %673 = vmatprep.subr.mxu0 0.0
        %674 = vmatpush1.msra.mxu0 0.0
        %675 = vmatprep.subr.mxu0 0.0
        %676 = vmatpush1.msra.mxu0 0.0
        %677 = vmatprep.subr.mxu0 0.0
        %678 = vmatpush1.msra.mxu0 0.0
        %679 = vmatprep.subr.mxu0 0.0
        %680 = vmatpush1.msra.mxu0 0.0
        %681 = vmatprep.subr.mxu0 0.0
        %682 = vmatpush1.msra.mxu0 0.0
        %683 = vmatprep.subr.mxu0 0.0
        %684 = vmatpush1.msra.mxu0 0.0
        %685 = vmatprep.subr.mxu0 0.0
        %686 = vmatpush1.msra.mxu0 0.0
        %687 = vmatprep.subr.mxu0 0.0
        %688 = vmatpush1.msra.mxu0 0.0
        %689 = vmatprep.subr.mxu0 0.0
        %690 = vmatpush1.msra.mxu0 0.0
        %691 = vmatprep.subr.mxu0 0.0
        %692 = vmatpush1.msra.mxu0 0.0
        %693 = vmatprep.subr.mxu0 0.0
        %694 = vmatpush1.msra.mxu0 0.0
        %695 = vmatprep.subr.mxu0 0.0
        %696 = vmatpush1.msra.mxu0 0.0
        %697 = vmatprep.subr.mxu0 0.0
        %698 = vmatpush1.msra.mxu0 0.0
        %699 = vmatprep.subr.mxu0 0.0
        %700 = vmatpush1.msra.mxu0 0.0
        %701 = vmatprep.subr.mxu0 0.0
        %702 = vmatpush1.msra.mxu0 0.0
        %703 = vmatprep.subr.mxu0 0.0
        %704 = vmatpush1.msra.mxu0 0.0
        %705 = vmatprep.subr.mxu0 0.0
        %706 = vmatpush1.msra.mxu0 0.0
        %707 = vmatprep.subr.mxu0 0.0
        %708 = vmatpush1.msra.mxu0 0.0
        %709 = vmatprep.subr.mxu0 0.0
        %710 = vmatpush1.msra.mxu0 0.0
        %711 = vmatprep.mubr.f32.mxu0 0.0
        %v712 = vand.u32 %v294, 4294901760
        %713 = vmatmul.mubr.f32.gmra.mrb[0].mxu0 %v712
        %v714 = vpop.f32.mrb[0].mxu0
        %v715 = vadd.f32 %v629, %v714
        %v716 = vpop.f32.mrb[0].mxu0
        %717 = vdwg.mxu0
        %718 = vmatprep.subr.mxu0 0.0
        %v719 = vand.u32 %v259, 4294901760
        %720 = vmatpush1.msra.mxu0 %v719
        %721 = vmatprep.subr.mxu0 0.0
        %v722 = vand.u32 %v268, 4294901760
        %723 = vmatpush1.msra.mxu0 %v722
        %724 = vmatprep.subr.mxu0 0.0
        %v725 = vand.u32 %v275, 4294901760
        %726 = vmatpush1.msra.mxu0 %v725
        %727 = vmatprep.subr.mxu0 0.0
        %v728 = vand.u32 %v282, 4294901760
        %729 = vmatpush1.msra.mxu0 %v728
        %730 = vmatprep.subr.mxu0 0.0
        %v731 = vand.u32 %v289, 4294901760
        %732 = vmatpush1.msra.mxu0 %v731
        %733 = vmatprep.subr.mxu0 0.0
        %734 = vmatpush1.msra.mxu0 0.0
        %735 = vmatprep.subr.mxu0 0.0
        %736 = vmatpush1.msra.mxu0 0.0
        %737 = vmatprep.subr.mxu0 0.0
        %738 = vmatpush1.msra.mxu0 0.0
        %739 = vmatprep.subr.mxu0 0.0
        %740 = vmatpush1.msra.mxu0 0.0
        %741 = vmatprep.subr.mxu0 0.0
        %742 = vmatpush1.msra.mxu0 0.0
        %743 = vmatprep.subr.mxu0 0.0
        %744 = vmatpush1.msra.mxu0 0.0
        %745 = vmatprep.subr.mxu0 0.0
        %746 = vmatpush1.msra.mxu0 0.0
        %747 = vmatprep.subr.mxu0 0.0
        %748 = vmatpush1.msra.mxu0 0.0
        %749 = vmatprep.subr.mxu0 0.0
        %750 = vmatpush1.msra.mxu0 0.0
        %751 = vmatprep.subr.mxu0 0.0
        %752 = vmatpush1.msra.mxu0 0.0
        %753 = vmatprep.subr.mxu0 0.0
        %754 = vmatpush1.msra.mxu0 0.0
        %755 = vmatprep.subr.mxu0 0.0
        %756 = vmatpush1.msra.mxu0 0.0
        %757 = vmatprep.subr.mxu0 0.0
        %758 = vmatpush1.msra.mxu0 0.0
        %759 = vmatprep.subr.mxu0 0.0
        %760 = vmatpush1.msra.mxu0 0.0
        %761 = vmatprep.subr.mxu0 0.0
        %762 = vmatpush1.msra.mxu0 0.0
        %763 = vmatprep.subr.mxu0 0.0
        %764 = vmatpush1.msra.mxu0 0.0
        %765 = vmatprep.subr.mxu0 0.0
        %766 = vmatpush1.msra.mxu0 0.0
        %767 = vmatprep.subr.mxu0 0.0
        %768 = vmatpush1.msra.mxu0 0.0
        %769 = vmatprep.subr.mxu0 0.0
        %770 = vmatpush1.msra.mxu0 0.0
        %771 = vmatprep.subr.mxu0 0.0
        %772 = vmatpush1.msra.mxu0 0.0
        %773 = vmatprep.subr.mxu0 0.0
        %774 = vmatpush1.msra.mxu0 0.0
        %775 = vmatprep.subr.mxu0 0.0
        %776 = vmatpush1.msra.mxu0 0.0
        %777 = vmatprep.subr.mxu0 0.0
        %778 = vmatpush1.msra.mxu0 0.0
        %779 = vmatprep.subr.mxu0 0.0
        %780 = vmatpush1.msra.mxu0 0.0
        %781 = vmatprep.subr.mxu0 0.0
        %782 = vmatpush1.msra.mxu0 0.0
        %783 = vmatprep.subr.mxu0 0.0
        %784 = vmatpush1.msra.mxu0 0.0
        %785 = vmatprep.subr.mxu0 0.0
        %786 = vmatpush1.msra.mxu0 0.0
        %787 = vmatprep.mubr.f32.mxu0 0.0
        %v788 = vand.u32 %v294, 4294901760
        %789 = vmatmul.mubr.f32.gmra.mrb[0].mxu0 %v788
        %v790 = vpop.f32.mrb[0].mxu0
        %v791 = vadd.f32 %v715, %v790
        %v792 = vpop.f32.mrb[0].mxu0
        %793 = vdwg.mxu0
        %794 = vst [vmem:[%s257] sm:$0xff] %v791
        %s795 = sand.u32 %s122, 1
        %s796 = scalar_lea.sflag [#allocation4], %s795
        %s797 = sand.u32 %s122, 1
        %s798 = smul.addr %s797, 8
        %s799 = scalar_lea.vmem [#allocation8], %s798
        // Predicated region
        $region45: #{tpu_custom_call.1} parent=31 // pred_check
          %p800 = pneg %p132
        $region46: #{tpu_custom_call.1} parent=31 // pred_check_branch
          %802 = sbr.rel (%p800) target = $region48
        $region47: #{tpu_custom_call.1} parent=31 // pred_region
          %s804 = ssub.s32 128, 128
          %805 = vsyncadd %s796, %s804
          %s806 = sadd.s32 %s26, %s25
          %s807 = smul.addr %s806, 128
          %s808 = scalar_lea.hbm %s3, %s807
          %s810 = sshll.u32 %s799, 4
          %s811 = int_to_ptr.vmem [resolvable:$true] %s810
          %813 = dma.vmem_to_hbm [thread:$0]  %s811, 128, %s808, %s796
        $region48: #{tpu_custom_call.1} parent=31 // pred_fallthru
          _
      $region32: #{tpu_custom_call.1} parent=5 // pred_fallthru
        _
      %p814 = scmp.le.s32.totalorder 2, %s16
      // Predicated region
      $region49: #{tpu_custom_call.1} parent=5 // pred_check
        %p815 = pneg %p814
      $region50: #{tpu_custom_call.1} parent=5 // pred_check_branch
        %817 = sbr.rel (%p815) target = $region52
      $region51: #{tpu_custom_call.1} parent=5 // pred_region
        %s818 = ssub.s32 %s16, 2
        // Predicated region
        $region53: #{tpu_custom_call.1} parent=51 // pred_check
          %p819 = pneg %p138
        $region54: #{tpu_custom_call.1} parent=51 // pred_check_branch
          %821 = sbr.rel (%p819) target = $region56
        $region55: #{tpu_custom_call.1} parent=51 // pred_region
          %s822 = sand.u32 %s123, 1
          %s823 = scalar_lea.sflag [#allocation4], %s822
          %s824 = sand.u32 %s123, 1
          %s825 = smul.addr %s824, 8
          %s826 = scalar_lea.vmem [#allocation8], %s825
          %827 = dma.done %s823, 128
        $region56: #{tpu_custom_call.1} parent=51 // pred_fallthru
          _
      $region52: #{tpu_custom_call.1} parent=5 // pred_fallthru
        _
    $region6: #{tpu_custom_call.1} parent=1 // loop_footer
      %s20 = sadd.s32 1, %s16
    $region7: #{tpu_custom_call.1} parent=1 // loop_footer_branch
      %15 = sbr.rel target = $region3
    $region8: #{tpu_custom_call.1} parent=1 // loop_exit
      _
    %828 = vsyncpa [#allocation3], 1
    %s829 = scalar_lea.sflag [#allocation3], 1
    %830 = vsyncpa %s829, 1
    %831 = vsyncpa [#allocation6], 1
    %s832 = scalar_lea.sflag [#allocation6], 1
    %833 = vsyncpa %s832, 1
    %834 = vsyncpa [#allocation4], 1
    %s835 = scalar_lea.sflag [#allocation4], 1
    %836 = vsyncpa %s835, 1

</llo_original>
